<compile_context>
chip_gen: v7x
topology: tpu7x:2x2x1
jax: 0.10.0
libtpu: 0.0.40
codegen_flags: <defaults>
</compile_context>

<pallas_src>
import functools

import jax
import jax.numpy as jnp
from jax.experimental import pallas as pl
from jax.experimental.pallas import tpu as pltpu


def _contrastive_loss_kernel(z1_ref, z2_ref, out_ref,
                             z1n_ref, rowsum_ref, simdiag_ref,
                             col_ref, diag_ref, loss_ref,
                             *, tau, mean, n_rows, tile, matmul_dtype):
    i = pl.program_id(0)          # row-tile index (z1 rows)
    k = pl.program_id(1)          # column-tile index (z2 rows); innermost
    nk = pl.num_programs(1)

    inv_tau = jnp.float32(1.0 / tau)
    eps_sq = jnp.float32(1e-24)   # (F.normalize eps=1e-12)^2, clamp on sum-of-squares

    # ---- one-time init: zero the cross-grid accumulators --------------------
    @pl.when(jnp.logical_and(i == 0, k == 0))
    def _init():
        col_ref[...] = jnp.zeros_like(col_ref)
        loss_ref[...] = jnp.zeros_like(loss_ref)

    # ---- per-row-tile init: normalize z1 tile once, fold 1/tau in -----------
    @pl.when(k == 0)
    def _row_init():
        z1 = z1_ref[...].astype(jnp.float32)
        inv1 = jax.lax.rsqrt(
            jnp.maximum(jnp.sum(z1 * z1, axis=-1, keepdims=True), eps_sq))
        z1n_ref[...] = z1 * (inv1 * inv_tau)          # normalized AND scaled by 1/tau
        rowsum_ref[...] = jnp.zeros_like(rowsum_ref)

    # ---- normalize this z2 column tile (cheap O(T*D), overlapped by pipeline)
    z2 = z2_ref[...].astype(jnp.float32)
    inv2 = jax.lax.rsqrt(
        jnp.maximum(jnp.sum(z2 * z2, axis=-1, keepdims=True), eps_sq))
    z2n = z2 * inv2                                    # (T, D) f32

    z1n = z1n_ref[...]                                 # (T, D) f32, 1/tau folded in

    # ---- S tile = exp(z1n_scaled @ z2n^T): contracted-last-dims MXU dot -----
    s = jax.lax.dot_general(
        z1n.astype(matmul_dtype), z2n.astype(matmul_dtype),
        dimension_numbers=(((1,), (1,)), ((), ())),
        preferred_element_type=jnp.float32)            # (T, T) f32
    S = jnp.exp(s)

    # ---- accumulate row sums (carried over k) and lane-dense column slab ----
    rowsum_ref[...] += jnp.sum(S, axis=1, keepdims=True)          # (T, 1)
    col_ref[pl.ds(k, 1), :] += jnp.sum(S, axis=0, keepdims=True)  # (1, T) slab k

    # ---- diagonal block: only when the column tile covers this row range ----
    @pl.when(k == i)
    def _diag():
        # f32 scaled diagonal similarity (exact -2*sim term; no log(exp(x)))
        simdiag_ref[...] = jnp.sum(z1n * z2n, axis=-1, keepdims=True)   # (T, 1)
        # lane-dense exp-diagonal taken straight from S (matches row/col sums)
        r = jax.lax.broadcasted_iota(jnp.int32, S.shape, 0)
        c = jax.lax.broadcasted_iota(jnp.int32, S.shape, 1)
        d_lane = jnp.sum(jnp.where(r == c, S, 0.0), axis=0, keepdims=True)
        diag_ref[pl.ds(i, 1), :] = d_lane                               # (1, T)

    # ---- per-row-tile finalize: fused row log terms, vector accumulate ------
    @pl.when(k == nk - 1)
    def _row_fin():
        sim_d = simdiag_ref[...]                       # already divided by tau
        d_row = jnp.exp(sim_d)
        term = jnp.log(2.0 * rowsum_ref[...] - d_row) - 2.0 * sim_d
        loss_ref[...] += jnp.sum(term, keepdims=True)  # (1,1) VMEM vector add

    # ---- global finalize: column log terms + scaling, single output write ---
    @pl.when(jnp.logical_and(i == pl.num_programs(0) - 1, k == nk - 1))
    def _fin():
        col_terms = jnp.log(2.0 * col_ref[...] - diag_ref[...])   # (ng, T)
        total = loss_ref[...] + jnp.sum(col_terms, keepdims=True)
        total = total * jnp.float32(0.5)
        if mean:
            total = total * jnp.float32(1.0 / n_rows)
        out_ref[...] = total


def contrastive_loss(z1, z2, tau, mean=True, max_tile_rows=512,
                     matmul_dtype=jnp.bfloat16):
    z1 = jnp.asarray(z1, jnp.float32)
    z2 = jnp.asarray(z2, jnp.float32)
    n, d = z1.shape
    assert z2.shape == (n, d)

    # VMEM budget: cap at ~70% of physical VMEM (v7x-safe), 64 MiB fallback.
    try:
        cap = int(pltpu.get_tpu_info().vmem_capacity_bytes)
    except Exception:
        cap = 64 * 2 ** 20
    budget = int(cap * 0.7)

    def step_bytes(t, ng):
        # double-buffered z1/z2 input tiles + z1n scratch (f32)
        b = 4 * (2 * t * d + 2 * t * d + t * d)
        # S + matmul/exp/mask temporaries (f32)
        b += 4 * 4 * t * t
        # rowsum/simdiag (lane-padded to 128)
        b += 4 * 2 * t * 128
        # bf16 operand casts
        b += 2 * 2 * t * d
        # col/diag (ng, t) slabs (sublane-padded)
        b += 4 * 2 * (ng + 8) * max(t, 128)
        return b + (4 << 20)          # headroom for compiler-internal scratch

    # Candidate tiles: divisors of n, multiples of 8, descending; pick the
    # largest whose per-step footprint fits the budget.
    cands = []
    if n % 8 == 0:
        t = min(max_tile_rows, n)
        t -= t % 8
        while t >= 8:
            if n % t == 0:
                cands.append(t)
            t -= 8
    if not cands:
        cands = [n]                   # odd small n: single full-extent tile
    tile = cands[-1]
    for t in cands:
        if step_bytes(t, n // t) <= budget:
            tile = t
            break

    ng = n // tile
    est = step_bytes(tile, ng)
    vmem_limit = int(min(max(est, 32 * 2 ** 20), int(cap * 0.9)))

    kernel = functools.partial(
        _contrastive_loss_kernel,
        tau=float(tau), mean=bool(mean), n_rows=n, tile=tile,
        matmul_dtype=matmul_dtype)

    out = pl.pallas_call(
        kernel,
        out_shape=jax.ShapeDtypeStruct((1, 1), jnp.float32),
        grid=(ng, ng),
        in_specs=[
            pl.BlockSpec((tile, d), lambda i, k: (i, 0)),   # z1 row tile (constant over k)
            pl.BlockSpec((tile, d), lambda i, k: (k, 0)),   # z2 column tile (streamed)
        ],
        out_specs=pl.BlockSpec((1, 1), lambda i, k: (0, 0)),
        scratch_shapes=[
            pltpu.VMEM((tile, d), jnp.float32),   # z1n (normalized, /tau), per row tile
            pltpu.VMEM((tile, 1), jnp.float32),   # row sums, carried over k
            pltpu.VMEM((tile, 1), jnp.float32),   # scaled diagonal similarity (f32)
            pltpu.VMEM((ng, tile), jnp.float32),  # column sums; [k, c] <-> col k*T+c
            pltpu.VMEM((ng, tile), jnp.float32),  # exp-diagonal; [i, c] <-> col i*T+c
            pltpu.VMEM((1, 1), jnp.float32),      # running scalar loss terms
        ],
        compiler_params=pltpu.CompilerParams(
            dimension_semantics=("arbitrary", "arbitrary"),
            vmem_limit_bytes=vmem_limit,
        ),
    )(z1, z2)
    return out[0, 0]


def _reference_loss(z1, z2, tau, mean=True):
    # Pure-JAX reference mirroring the PyTorch module (refl_sim == between_sim).
    def normalize(z):
        nrm = jnp.linalg.norm(z, axis=1, keepdims=True)
        return z / jnp.maximum(nrm, 1e-12)

    def semi(a, b):
        S = jnp.exp(jnp.dot(normalize(a), normalize(b).T) / tau)
        dg = jnp.diag(S)
        return -jnp.log(dg / (2.0 * S.sum(1) - dg))

    l1 = semi(z1, z2)
    l2 = semi(z2, z1)
    ret = (l1 + l2) * 0.5
    return ret.mean() if mean else ret.sum()


if __name__ == "__main__":
    tau = 0.5
    key = jax.random.PRNGKey(0)
    k1, k2, k3, k4 = jax.random.split(key, 4)

    # 1) tiny single-tile case, f32 MXU path, tight tolerance
    z1a = jax.random.normal(k1, (8, 32), dtype=jnp.float32)
    z2a = jax.random.normal(k2, (8, 32), dtype=jnp.float32)
    out_a = jax.block_until_ready(
        contrastive_loss(z1a, z2a, tau, mean=True, matmul_dtype=jnp.float32))
    ref_a = _reference_loss(z1a, z2a, tau, mean=True)
    assert jnp.allclose(out_a, ref_a, rtol=1e-4, atol=1e-4), (out_a, ref_a)

    # 2) multi-tile (2x2 grid) case, f32 MXU path, sum reduction
    z1b = jax.random.normal(k3, (256, 32), dtype=jnp.float32)
    z2b = jax.random.normal(k4, (256, 32), dtype=jnp.float32)
    out_b = jax.block_until_ready(
        contrastive_loss(z1b, z2b, tau, mean=False, max_tile_rows=128,
                         matmul_dtype=jnp.float32))
    ref_b = _reference_loss(z1b, z2b, tau, mean=False)
    assert jnp.allclose(out_b, ref_b, rtol=1e-4, atol=1e-4), (out_b, ref_b)

    # 3) default bf16 MXU path (perf default), looser tolerance
    out_c = jax.block_until_ready(
        contrastive_loss(z1b, z2b, tau, mean=True, max_tile_rows=128))
    ref_c = _reference_loss(z1b, z2b, tau, mean=True)
    assert jnp.allclose(out_c, ref_c, rtol=5e-2, atol=5e-2), (out_c, ref_c)

    print("KERNEL_OK")
</pallas_src>

<mosaic_0001>
module attributes {stable_mosaic.version = 11 : i64} {
  func.func @_contrastive_loss_kernel(%arg0: i32, %arg1: i32, %arg2: memref<8x32xf32, #tpu.memory_space<vmem>>, %arg3: memref<8x32xf32, #tpu.memory_space<vmem>>, %arg4: memref<1x1xf32, #tpu.memory_space<vmem>>, %arg5: memref<8x32xf32, #tpu.memory_space<vmem>>, %arg6: memref<8x1xf32, #tpu.memory_space<vmem>>, %arg7: memref<8x1xf32, #tpu.memory_space<vmem>>, %arg8: memref<1x8xf32, #tpu.memory_space<vmem>>, %arg9: memref<1x8xf32, #tpu.memory_space<vmem>>, %arg10: memref<1x1xf32, #tpu.memory_space<vmem>>) attributes {dimension_semantics = [#tpu.dimension_semantics<arbitrary>, #tpu.dimension_semantics<arbitrary>], iteration_bounds = array<i64: 1, 1>, scalar_prefetch = 0 : i64, scratch_operands = 6 : i64, tpu.core_type = #tpu.core_type<tc>, window_params = [{transform_indices = @transform_0, window_bounds = array<i64: 8, 32>}, {transform_indices = @transform_1, window_bounds = array<i64: 8, 32>}, {pipeline_mode = #tpu.pipeline_mode<synchronous>, transform_indices = @transform_2, window_bounds = array<i64: 1, 1>}]} {
    %c0_i32 = arith.constant 0 : i32
    %0 = arith.cmpi eq, %arg0, %c0_i32 : i32
    %c0_i32_0 = arith.constant 0 : i32
    %1 = arith.cmpi eq, %arg1, %c0_i32_0 : i32
    %2 = arith.andi %0, %1 : i1
    %3 = arith.extui %2 : i1 to i32
    %c0_i32_1 = arith.constant 0 : i32
    %4 = arith.cmpi ne, %3, %c0_i32_1 : i32
    scf.if %4 {
      %cst_25 = arith.constant 0.000000e+00 : f32
      %43 = vector.broadcast %cst_25 : f32 to vector<1x8xf32>
      %c0_26 = arith.constant 0 : index
      %c0_27 = arith.constant 0 : index
      %44 = vector.load %arg8[%c0_26, %c0_27] : memref<1x8xf32, #tpu.memory_space<vmem>>, vector<1x8xf32>
      tpu.vector_store %arg8[%c0_26, %c0_27], %43 {strides = array<i32>} : memref<1x8xf32, #tpu.memory_space<vmem>>, vector<1x8xf32>,
      %cst_28 = arith.constant 0.000000e+00 : f32
      %45 = vector.broadcast %cst_28 : f32 to vector<1x1xf32>
      %c0_29 = arith.constant 0 : index
      %c0_30 = arith.constant 0 : index
      %46 = vector.load %arg10[%c0_29, %c0_30] : memref<1x1xf32, #tpu.memory_space<vmem>>, vector<1x1xf32>
      tpu.vector_store %arg10[%c0_29, %c0_30], %45 {strides = array<i32>} : memref<1x1xf32, #tpu.memory_space<vmem>>, vector<1x1xf32>,
    } else {
    }
    %c0_i32_2 = arith.constant 0 : i32
    %5 = arith.cmpi eq, %arg1, %c0_i32_2 : i32
    %6 = arith.extui %5 : i1 to i32
    %cst = arith.constant 1.000000e-24 : f32
    %cst_3 = arith.constant 2.000000e+00 : f32
    %c0_i32_4 = arith.constant 0 : i32
    %7 = arith.cmpi ne, %6, %c0_i32_4 : i32
    scf.if %7 {
      %c0_25 = arith.constant 0 : index
      %c0_26 = arith.constant 0 : index
      %43 = vector.load %arg2[%c0_25, %c0_26] : memref<8x32xf32, #tpu.memory_space<vmem>>, vector<8x32xf32>
      %44 = arith.mulf %43, %43 : vector<8x32xf32>
      %cst_27 = arith.constant dense<0.000000e+00> : vector<8xf32>
      %45 = vector.multi_reduction <add>, %44, %cst_27 [1] : vector<8x32xf32> to vector<8xf32>
      %46 = vector.shape_cast %45 : vector<8xf32> to vector<8x1xf32>
      %47 = vector.broadcast %cst : f32 to vector<8x1xf32>
      %48 = arith.maximumf %46, %47 : vector<8x1xf32>
      %49 = math.rsqrt %48 : vector<8x1xf32>
      %50 = vector.broadcast %cst_3 : f32 to vector<8x1xf32>
      %51 = arith.mulf %49, %50 : vector<8x1xf32>
      %52 = vector.broadcast %51 : vector<8x1xf32> to vector<8x32xf32>
      %53 = arith.mulf %43, %52 : vector<8x32xf32>
      %c0_28 = arith.constant 0 : index
      %c0_29 = arith.constant 0 : index
      %54 = vector.load %arg5[%c0_28, %c0_29] : memref<8x32xf32, #tpu.memory_space<vmem>>, vector<8x32xf32>
      tpu.vector_store %arg5[%c0_28, %c0_29], %53 {strides = array<i32>} : memref<8x32xf32, #tpu.memory_space<vmem>>, vector<8x32xf32>,
      %cst_30 = arith.constant 0.000000e+00 : f32
      %55 = vector.broadcast %cst_30 : f32 to vector<8x1xf32>
      %c0_31 = arith.constant 0 : index
      %c0_32 = arith.constant 0 : index
      %56 = vector.load %arg6[%c0_31, %c0_32] : memref<8x1xf32, #tpu.memory_space<vmem>>, vector<8x1xf32>
      tpu.vector_store %arg6[%c0_31, %c0_32], %55 {strides = array<i32>} : memref<8x1xf32, #tpu.memory_space<vmem>>, vector<8x1xf32>,
    } else {
    }
    %c0 = arith.constant 0 : index
    %c0_5 = arith.constant 0 : index
    %8 = vector.load %arg3[%c0, %c0_5] : memref<8x32xf32, #tpu.memory_space<vmem>>, vector<8x32xf32>
    %9 = arith.mulf %8, %8 : vector<8x32xf32>
    %cst_6 = arith.constant dense<0.000000e+00> : vector<8xf32>
    %10 = vector.multi_reduction <add>, %9, %cst_6 [1] : vector<8x32xf32> to vector<8xf32>
    %11 = vector.shape_cast %10 : vector<8xf32> to vector<8x1xf32>
    %cst_7 = arith.constant 1.000000e-24 : f32
    %12 = vector.broadcast %cst_7 : f32 to vector<8x1xf32>
    %13 = arith.maximumf %11, %12 : vector<8x1xf32>
    %14 = math.rsqrt %13 : vector<8x1xf32>
    %15 = vector.broadcast %14 : vector<8x1xf32> to vector<8x32xf32>
    %16 = arith.mulf %8, %15 : vector<8x32xf32>
    %c0_8 = arith.constant 0 : index
    %c0_9 = arith.constant 0 : index
    %17 = vector.load %arg5[%c0_8, %c0_9] : memref<8x32xf32, #tpu.memory_space<vmem>>, vector<8x32xf32>
    %cst_10 = arith.constant dense<0.000000e+00> : vector<8x8xf32>
    %18 = tpu.matmul %17, %16, %cst_10 {dimension_numbers = #tpu.dot_dimension_numbers<[1], [1], [0], [0], [0, 0, 1, 0], [], []>} : vector<8x32xf32>, vector<8x32xf32>, vector<8x8xf32> -> vector<8x8xf32>
    %19 = math.exp %18 : vector<8x8xf32>
    %c0_11 = arith.constant 0 : index
    %c0_12 = arith.constant 0 : index
    %20 = vector.load %arg6[%c0_11, %c0_12] : memref<8x1xf32, #tpu.memory_space<vmem>>, vector<8x1xf32>
    %cst_13 = arith.constant dense<0.000000e+00> : vector<8xf32>
    %21 = vector.multi_reduction <add>, %19, %cst_13 [1] : vector<8x8xf32> to vector<8xf32>
    %22 = vector.shape_cast %21 : vector<8xf32> to vector<8x1xf32>
    %23 = arith.addf %20, %22 : vector<8x1xf32>
    %c0_14 = arith.constant 0 : index
    %c0_15 = arith.constant 0 : index
    %24 = vector.load %arg6[%c0_14, %c0_15] : memref<8x1xf32, #tpu.memory_space<vmem>>, vector<8x1xf32>
    tpu.vector_store %arg6[%c0_14, %c0_15], %23 {strides = array<i32>} : memref<8x1xf32, #tpu.memory_space<vmem>>, vector<8x1xf32>,
    %25 = arith.index_cast %arg1 : i32 to index
    %c0_16 = arith.constant 0 : index
    %26 = vector.load %arg8[%25, %c0_16] : memref<1x8xf32, #tpu.memory_space<vmem>>, vector<1x8xf32>
    %cst_17 = arith.constant dense<0.000000e+00> : vector<8xf32>
    %27 = vector.multi_reduction <add>, %19, %cst_17 [0] : vector<8x8xf32> to vector<8xf32>
    %28 = vector.shape_cast %27 : vector<8xf32> to vector<1x8xf32>
    %29 = arith.addf %26, %28 : vector<1x8xf32>
    %30 = arith.index_cast %arg1 : i32 to index
    %c0_18 = arith.constant 0 : index
    %31 = vector.load %arg8[%30, %c0_18] : memref<1x8xf32, #tpu.memory_space<vmem>>, vector<1x8xf32>
    tpu.vector_store %arg8[%30, %c0_18], %29 {strides = array<i32>} : memref<1x8xf32, #tpu.memory_space<vmem>>, vector<1x8xf32>,
    %32 = arith.cmpi eq, %arg1, %arg0 : i32
    %33 = arith.extui %32 : i1 to i32
    %c0_i32_19 = arith.constant 0 : i32
    %34 = arith.cmpi ne, %33, %c0_i32_19 : i32
    scf.if %34 {
      %43 = arith.mulf %17, %16 : vector<8x32xf32>
      %cst_25 = arith.constant dense<0.000000e+00> : vector<8xf32>
      %44 = vector.multi_reduction <add>, %43, %cst_25 [1] : vector<8x32xf32> to vector<8xf32>
      %45 = vector.shape_cast %44 : vector<8xf32> to vector<8x1xf32>
      %c0_26 = arith.constant 0 : index
      %c0_27 = arith.constant 0 : index
      %46 = vector.load %arg7[%c0_26, %c0_27] : memref<8x1xf32, #tpu.memory_space<vmem>>, vector<8x1xf32>
      tpu.vector_store %arg7[%c0_26, %c0_27], %45 {strides = array<i32>} : memref<8x1xf32, #tpu.memory_space<vmem>>, vector<8x1xf32>,
      %47 = tpu.iota {dimensions = array<i32: 0>} : vector<8x8xi32>
      %48 = tpu.iota {dimensions = array<i32: 1>} : vector<8x8xi32>
      %49 = arith.cmpi eq, %47, %48 : vector<8x8xi32>
      %cst_28 = arith.constant 0.000000e+00 : f32
      %50 = vector.broadcast %cst_28 : f32 to vector<8x8xf32>
      %51 = arith.select %49, %19, %50 : vector<8x8xi1>, vector<8x8xf32>
      %cst_29 = arith.constant dense<0.000000e+00> : vector<8xf32>
      %52 = vector.multi_reduction <add>, %51, %cst_29 [0] : vector<8x8xf32> to vector<8xf32>
      %53 = vector.shape_cast %52 : vector<8xf32> to vector<1x8xf32>
      %54 = arith.index_cast %arg0 : i32 to index
      %c0_30 = arith.constant 0 : index
      %55 = vector.load %arg9[%54, %c0_30] : memref<1x8xf32, #tpu.memory_space<vmem>>, vector<1x8xf32>
      tpu.vector_store %arg9[%54, %c0_30], %53 {strides = array<i32>} : memref<1x8xf32, #tpu.memory_space<vmem>>, vector<1x8xf32>,
    } else {
    }
    %c0_i32_20 = arith.constant 0 : i32
    %35 = arith.cmpi eq, %arg1, %c0_i32_20 : i32
    %36 = arith.extui %35 : i1 to i32
    %c0_i32_21 = arith.constant 0 : i32
    %37 = arith.cmpi ne, %36, %c0_i32_21 : i32
    scf.if %37 {
      %c0_25 = arith.constant 0 : index
      %c0_26 = arith.constant 0 : index
      %43 = vector.load %arg7[%c0_25, %c0_26] : memref<8x1xf32, #tpu.memory_space<vmem>>, vector<8x1xf32>
      %44 = math.exp %43 : vector<8x1xf32>
      %c0_27 = arith.constant 0 : index
      %c0_28 = arith.constant 0 : index
      %45 = vector.load %arg6[%c0_27, %c0_28] : memref<8x1xf32, #tpu.memory_space<vmem>>, vector<8x1xf32>
      %cst_29 = arith.constant 2.000000e+00 : f32
      %46 = vector.broadcast %cst_29 : f32 to vector<8x1xf32>
      %47 = arith.mulf %46, %45 : vector<8x1xf32>
      %48 = arith.subf %47, %44 : vector<8x1xf32>
      %49 = math.log %48 : vector<8x1xf32>
      %cst_30 = arith.constant 2.000000e+00 : f32
      %50 = vector.broadcast %cst_30 : f32 to vector<8x1xf32>
      %51 = arith.mulf %50, %43 : vector<8x1xf32>
      %52 = arith.subf %49, %51 : vector<8x1xf32>
      %c0_31 = arith.constant 0 : index
      %c0_32 = arith.constant 0 : index
      %53 = vector.load %arg10[%c0_31, %c0_32] : memref<1x1xf32, #tpu.memory_space<vmem>>, vector<1x1xf32>
      %54 = vector.shape_cast %52 : vector<8x1xf32> to vector<1x8x1xf32>
      %cst_33 = arith.constant dense<0.000000e+00> : vector<1xf32>
      %55 = vector.multi_reduction <add>, %54, %cst_33 [1, 2] : vector<1x8x1xf32> to vector<1xf32>
      %56 = vector.shape_cast %55 : vector<1xf32> to vector<1x1x1xf32>
      %57 = vector.extract %56[0, 0, 0] : f32 from vector<1x1x1xf32>
      %58 = vector.broadcast %57 : f32 to vector<1x1xf32>
      %59 = arith.addf %53, %58 : vector<1x1xf32>
      %c0_34 = arith.constant 0 : index
      %c0_35 = arith.constant 0 : index
      %60 = vector.load %arg10[%c0_34, %c0_35] : memref<1x1xf32, #tpu.memory_space<vmem>>, vector<1x1xf32>
      tpu.vector_store %arg10[%c0_34, %c0_35], %59 {strides = array<i32>} : memref<1x1xf32, #tpu.memory_space<vmem>>, vector<1x1xf32>,
    } else {
    }
    %c0_i32_22 = arith.constant 0 : i32
    %38 = arith.cmpi eq, %arg0, %c0_i32_22 : i32
    %c0_i32_23 = arith.constant 0 : i32
    %39 = arith.cmpi eq, %arg1, %c0_i32_23 : i32
    %40 = arith.andi %38, %39 : i1
    %41 = arith.extui %40 : i1 to i32
    %c0_i32_24 = arith.constant 0 : i32
    %42 = arith.cmpi ne, %41, %c0_i32_24 : i32
    scf.if %42 {
      %c0_25 = arith.constant 0 : index
      %c0_26 = arith.constant 0 : index
      %43 = vector.load %arg8[%c0_25, %c0_26] : memref<1x8xf32, #tpu.memory_space<vmem>>, vector<1x8xf32>
      %cst_27 = arith.constant 2.000000e+00 : f32
      %44 = vector.broadcast %cst_27 : f32 to vector<1x8xf32>
      %45 = arith.mulf %44, %43 : vector<1x8xf32>
      %c0_28 = arith.constant 0 : index
      %c0_29 = arith.constant 0 : index
      %46 = vector.load %arg9[%c0_28, %c0_29] : memref<1x8xf32, #tpu.memory_space<vmem>>, vector<1x8xf32>
      %47 = arith.subf %45, %46 : vector<1x8xf32>
      %48 = math.log %47 : vector<1x8xf32>
      %c0_30 = arith.constant 0 : index
      %c0_31 = arith.constant 0 : index
      %49 = vector.load %arg10[%c0_30, %c0_31] : memref<1x1xf32, #tpu.memory_space<vmem>>, vector<1x1xf32>
      %50 = vector.shape_cast %48 : vector<1x8xf32> to vector<1x1x8xf32>
      %cst_32 = arith.constant dense<0.000000e+00> : vector<1xf32>
      %51 = vector.multi_reduction <add>, %50, %cst_32 [1, 2] : vector<1x1x8xf32> to vector<1xf32>
      %52 = vector.shape_cast %51 : vector<1xf32> to vector<1x1x1xf32>
      %53 = vector.extract %52[0, 0, 0] : f32 from vector<1x1x1xf32>
      %54 = vector.broadcast %53 : f32 to vector<1x1xf32>
      %55 = arith.addf %49, %54 : vector<1x1xf32>
      %cst_33 = arith.constant 5.000000e-01 : f32
      %56 = vector.broadcast %cst_33 : f32 to vector<1x1xf32>
      %57 = arith.mulf %55, %56 : vector<1x1xf32>
      %cst_34 = arith.constant 1.250000e-01 : f32
      %58 = vector.broadcast %cst_34 : f32 to vector<1x1xf32>
      %59 = arith.mulf %57, %58 : vector<1x1xf32>
      %c0_35 = arith.constant 0 : index
      %c0_36 = arith.constant 0 : index
      %60 = vector.load %arg4[%c0_35, %c0_36] : memref<1x1xf32, #tpu.memory_space<vmem>>, vector<1x1xf32>
      tpu.vector_store %arg4[%c0_35, %c0_36], %59 {strides = array<i32>} : memref<1x1xf32, #tpu.memory_space<vmem>>, vector<1x1xf32>,
    } else {
    }
    return
  }
  func.func @transform_0(%arg0: i32, %arg1: i32) -> (i32, i32) {
    %c0_i32 = arith.constant 0 : i32
    %c0_i32_0 = arith.constant 0 : i32
    return %arg0, %c0_i32 : i32, i32
  }
  func.func @transform_1(%arg0: i32, %arg1: i32) -> (i32, i32) {
    %c0_i32 = arith.constant 0 : i32
    %c0_i32_0 = arith.constant 0 : i32
    return %arg1, %c0_i32 : i32, i32
  }
  func.func @transform_2(%arg0: i32, %arg1: i32) -> (i32, i32) {
    %c0_i32 = arith.constant 0 : i32
    %c0_i32_0 = arith.constant 0 : i32
    %c0_i32_1 = arith.constant 0 : i32
    return %c0_i32, %c0_i32_0 : i32, i32
  }
}

</mosaic_0001>

<llo_original>
// kernel: tpu_custom_call.1
$region0: #{tpu_custom_call.1}
  #allocation0 [shape = 'u32[]', space=smem, size = 0x4, offset = 0x4, fixed_abs, tag = 'smem constant byte address 0x4 - core index']
  #allocation1 [shape = 'u32[144,128]{1,0:T(1,128)}', space=vmem, size = 0x12000, scoped, tag = 'internal scratch']
  #allocation2 [shape = 'f32[8,32]{1,0:T(8,128)}', space=vmem, size = 0x1000, scoped, tag = 'scratch operand']
  #allocation3 [shape = 'f32[8,1]{1,0:T(8,128)}', space=vmem, size = 0x1000, scoped, tag = 'scratch operand']
  #allocation4 [shape = 'f32[8,1]{1,0:T(8,128)}', space=vmem, size = 0x1000, scoped, tag = 'scratch operand']
  #allocation5 [shape = 'f32[1,8]{1,0:T(1,128)}', space=vmem, size = 0x200, scoped, tag = 'scratch operand']
  #allocation6 [shape = 'f32[1,8]{1,0:T(1,128)}', space=vmem, size = 0x200, scoped, tag = 'scratch operand']
  #allocation7 [shape = 'f32[1,1]{1,0:T(1,128)}', space=vmem, size = 0x200, scoped, tag = 'scratch operand']
  %s0 = inlined_call_operand.hbm [shape: f32[8,32], index: 0, kind: input, shape index: {}]
  %s1 = inlined_call_operand.hbm [shape: f32[8,32], index: 1, kind: input, shape index: {}]
  %s2 = inlined_call_operand.hbm [shape: f32[1,1], index: 2, kind: output, shape index: {}]
  %s3 = sld [smem:[#allocation0]]
  $region46: #{tpu_custom_call.1} parent=0
    _
  %s5 = ssub.s32 1, %s3
  %s6 = scalar_select 0, %s5, %s3
  $region1: #{tpu_custom_call.1} parent=0
    #allocation8 [shape = 'u8[4096]{0}', space=vmem, size = 0x1000, scoped, tag = 'input window, operand 0, single buffered']
    #allocation9 [shape = 's32[1]{0}', space=sflag, size = 0x4, scoped, tag = 'scoped memory for tpu_custom_call.1']
    #allocation10 [shape = 's32[1]{0}', space=sflag, size = 0x4, scoped, tag = 'scoped memory for tpu_custom_call.1']
    #allocation11 [shape = 'u8[4096]{0}', space=vmem, size = 0x1000, scoped, tag = 'input window, operand 1, single buffered']
    #allocation12 [shape = 's32[1]{0}', space=sflag, size = 0x4, scoped, tag = 'scoped memory for tpu_custom_call.1']
    #allocation13 [shape = 'u8[512]{0}', space=vmem, size = 0x400, scoped, tag = 'output window, operand 0, single buffered']
    %7 = vsyncpa [#allocation9], 0
    %8 = vsyncpa [#allocation12], 0
    %9 = vsyncpa [#allocation10], 0
    // Predicated region
    $region2: #{tpu_custom_call.1} parent=1 // pred_check
      _
    $region3: #{tpu_custom_call.1} parent=1 // pred_check_branch
      %11 = sbr.rel (0) target = $region5
    $region4: #{tpu_custom_call.1} parent=1 // pred_region
      %s13 = ssub.s32 128, 128
      %14 = vsyncadd [#allocation9], %s13
      %s16 = sshll.u32 [#allocation8], 4
      %s17 = int_to_ptr.vmem [resolvable:$true] %s16
      %19 = dma.hbm_to_vmem [thread:$0]  %s0, 128, %s17, [#allocation9]
    $region5: #{tpu_custom_call.1} parent=1 // pred_fallthru
      _
    // Predicated region
    $region6: #{tpu_custom_call.1} parent=1 // pred_check
      _
    $region7: #{tpu_custom_call.1} parent=1 // pred_check_branch
      %21 = sbr.rel (0) target = $region9
    $region8: #{tpu_custom_call.1} parent=1 // pred_region
      %s23 = ssub.s32 128, 128
      %24 = vsyncadd [#allocation12], %s23
      %s26 = sshll.u32 [#allocation11], 4
      %s27 = int_to_ptr.vmem [resolvable:$true] %s26
      %29 = dma.hbm_to_vmem [thread:$0]  %s1, 128, %s27, [#allocation12]
    $region9: #{tpu_custom_call.1} parent=1 // pred_fallthru
      _
    // Predicated region
    $region10: #{tpu_custom_call.1} parent=1 // pred_check
      _
    $region11: #{tpu_custom_call.1} parent=1 // pred_check_branch
      %31 = sbr.rel (0) target = $region13
    $region12: #{tpu_custom_call.1} parent=1 // pred_region
      %32 = dma.done [#allocation9], 128
    $region13: #{tpu_custom_call.1} parent=1 // pred_fallthru
      _
    // Predicated region
    $region14: #{tpu_custom_call.1} parent=1 // pred_check
      _
    $region15: #{tpu_custom_call.1} parent=1 // pred_check_branch
      %34 = sbr.rel (0) target = $region17
    $region16: #{tpu_custom_call.1} parent=1 // pred_region
      %35 = dma.done [#allocation12], 128
    $region17: #{tpu_custom_call.1} parent=1 // pred_fallthru
      _
    %p36 = scmp.eq.s32.totalorder 0, 0
    %p37 = scmp.eq.s32.totalorder 0, 0
    %p38 = pnand %p36, %p37
    %p39 = pneg %p38
    // Predicated region
    $region18: #{tpu_custom_call.1} parent=1 // pred_check
      _
    $region19: #{tpu_custom_call.1} parent=1 // pred_check_branch
      %41 = sbr.rel (%p38) target = $region21
    $region20: #{tpu_custom_call.1} parent=1 // pred_region
      %vm42 = vcmask 57344
      %43 = vst.msk [vmem:[#allocation5] sm:$0x1] %vm42, 0.0
      %vm44 = vcmask 0
      %45 = vst.msk [vmem:[#allocation7] sm:$0x1] %vm44, 0.0
    $region21: #{tpu_custom_call.1} parent=1 // pred_fallthru
      _
    // Predicated region
    $region22: #{tpu_custom_call.1} parent=1 // pred_check
      %p46 = pneg %p37
    $region23: #{tpu_custom_call.1} parent=1 // pred_check_branch
      %48 = sbr.rel (%p46) target = $region25
    $region24: #{tpu_custom_call.1} parent=1 // pred_region
      %v49 = vld [vmem:[#allocation8] sm:$0xff]
      %v50 = vmul.f32 %v49, %v49
      %vm51 = vcmask 261120
      %v52 = vsel %vm51, %v50, 0.0
      %53 = vadd.xlane.f32.xlu0 %v52
      %v54 = vpop.xlane.xlu0 %53
      %v55 = vmax.f32 %v54, 1e-24
      %v56 = vrsqrt.pop %v55
      %v57 = vmul.f32 %v56, 2.0
      %v58 = vmul.f32 %v49, %v57
      %59 = vst.msk [vmem:[#allocation2] sm:$0xff] %vm51, %v58
      %vm60 = vcmask 7168
      %61 = vst.msk [vmem:[#allocation3] sm:$0xff] %vm60, 0.0
    $region25: #{tpu_custom_call.1} parent=1 // pred_fallthru
      _
    %v62 = vld [vmem:[#allocation11] sm:$0xff]
    %v63 = vmul.f32 %v62, %v62
    %vm64 = vcmask 261120
    %v65 = vsel %vm64, %v63, 0.0
    %66 = vadd.xlane.f32.xlu0 %v65
    %v67 = vpop.xlane.xlu0 %66
    %v68 = vmax.f32 %v67, 1e-24
    %v69 = vrsqrt.pop %v68
    %v70 = vmul.f32 %v62, %v69
    %v71 = vld [vmem:[#allocation2] sm:$0xff]
    %v73 = vsel %vm64, %v71, 0
    %v76 = vsel %vm64, %v70, 0
    %78 = vmatprep.subr.mxu0 0.0
    %79 = vmatpush1.xpose.msra.mxu0 %v76
    %80 = vmatprep.subr.mxu0 0.0
    %81 = vmatpush1.xpose.msra.mxu0 0.0
    %82 = vmatprep.subr.mxu0 0.0
    %83 = vmatpush1.xpose.msra.mxu0 0.0
    %84 = vmatprep.subr.mxu0 0.0
    %85 = vmatpush1.xpose.msra.mxu0 0.0
    %86 = vmatprep.subr.mxu0 0.0
    %87 = vmatpush1.xpose.msra.mxu0 0.0
    %88 = vmatprep.subr.mxu0 0.0
    %89 = vmatpush1.xpose.msra.mxu0 0.0
    %90 = vmatprep.subr.mxu0 0.0
    %91 = vmatpush1.xpose.msra.mxu0 0.0
    %92 = vmatprep.subr.mxu0 0.0
    %93 = vmatpush1.xpose.msra.mxu0 0.0
    %94 = vmatprep.subr.mxu0 0.0
    %95 = vmatpush1.xpose.msra.mxu0 0.0
    %96 = vmatprep.subr.mxu0 0.0
    %97 = vmatpush1.xpose.msra.mxu0 0.0
    %98 = vmatprep.subr.mxu0 0.0
    %99 = vmatpush1.xpose.msra.mxu0 0.0
    %100 = vmatprep.subr.mxu0 0.0
    %101 = vmatpush1.xpose.msra.mxu0 0.0
    %102 = vmatprep.subr.mxu0 0.0
    %103 = vmatpush1.xpose.msra.mxu0 0.0
    %104 = vmatprep.subr.mxu0 0.0
    %105 = vmatpush1.xpose.msra.mxu0 0.0
    %106 = vmatprep.subr.mxu0 0.0
    %107 = vmatpush1.xpose.msra.mxu0 0.0
    %108 = vmatprep.subr.mxu0 0.0
    %109 = vmatpush1.xpose.msra.mxu0 0.0
    %110 = vmatprep.subr.mxu0 0.0
    %111 = vmatpush1.xpose.msra.mxu0 0.0
    %112 = vmatprep.subr.mxu0 0.0
    %113 = vmatpush1.xpose.msra.mxu0 0.0
    %114 = vmatprep.subr.mxu0 0.0
    %115 = vmatpush1.xpose.msra.mxu0 0.0
    %116 = vmatprep.subr.mxu0 0.0
    %117 = vmatpush1.xpose.msra.mxu0 0.0
    %118 = vmatprep.subr.mxu0 0.0
    %119 = vmatpush1.xpose.msra.mxu0 0.0
    %120 = vmatprep.subr.mxu0 0.0
    %121 = vmatpush1.xpose.msra.mxu0 0.0
    %122 = vmatprep.subr.mxu0 0.0
    %123 = vmatpush1.xpose.msra.mxu0 0.0
    %124 = vmatprep.subr.mxu0 0.0
    %125 = vmatpush1.xpose.msra.mxu0 0.0
    %126 = vmatprep.subr.mxu0 0.0
    %127 = vmatpush1.xpose.msra.mxu0 0.0
    %128 = vmatprep.subr.mxu0 0.0
    %129 = vmatpush1.xpose.msra.mxu0 0.0
    %130 = vmatprep.subr.mxu0 0.0
    %131 = vmatpush1.xpose.msra.mxu0 0.0
    %132 = vmatprep.subr.mxu0 0.0
    %133 = vmatpush1.xpose.msra.mxu0 0.0
    %134 = vmatprep.subr.mxu0 0.0
    %135 = vmatpush1.xpose.msra.mxu0 0.0
    %136 = vmatprep.subr.mxu0 0.0
    %137 = vmatpush1.xpose.msra.mxu0 0.0
    %138 = vmatprep.subr.mxu0 0.0
    %139 = vmatpush1.xpose.msra.mxu0 0.0
    %140 = vmatprep.subr.mxu0 0.0
    %141 = vmatpush1.xpose.msra.mxu0 0.0
    %142 = vmatprep.mubr.f32.mxu0 0.0
    %143 = vmatmul.mubr.f32.gmra.mrb[0].mxu0 %v73
    %v144 = vpop.f32.mrb[0].mxu0
    %v145 = vadd.f32 0.0, %v144
    %v146 = vpop.f32.mrb[0].mxu0
    %147 = vdwg.mxu0
    %v148 = vmul.f32 %v145, 1.442695
    %v149 = vpow.pop %v148
    %v150 = vld [vmem:[#allocation3] sm:$0xff]
    %vm151 = vcmask 64512
    %v152 = vsel %vm151, %v149, 0.0
    %153 = vadd.xlane.f32.xlu0 %v152
    %v154 = vpop.xlane.xlu0 %153
    %v155 = vadd.f32 %v150, %v154
    %vm156 = vcmask 7168
    %157 = vst.msk [vmem:[#allocation3] sm:$0xff] %vm156, %v155
    %v158 = vld [vmem:[#allocation5] sm:$0x1]
    %v159 = vrot.slane %v152, 4
    %v160 = vadd.f32 %v152, %v159
    %v161 = vrot.slane %v160, 2
    %v162 = vadd.f32 %v160, %v161
    %v163 = vrot.slane %v162, 1
    %v164 = vadd.f32 %v162, %v163
    %v165 = vadd.f32 %v158, %v164
    %vm166 = vcmask 57344
    %167 = vst.msk [vmem:[#allocation5] sm:$0x1] %vm166, %v165
    %p168 = scmp.eq.s32.totalorder 0, 0
    // Predicated region
    $region26: #{tpu_custom_call.1} parent=1 // pred_check
      %p169 = pneg %p168
    $region27: #{tpu_custom_call.1} parent=1 // pred_check_branch
      %171 = sbr.rel (%p169) target = $region29
    $region28: #{tpu_custom_call.1} parent=1 // pred_region
      %v172 = vmul.f32 %v71, %v70
      %v173 = vsel %vm64, %v172, 0.0
      %174 = vadd.xlane.f32.xlu0 %v173
      %v175 = vpop.xlane.xlu0 %174
      %176 = vst.msk [vmem:[#allocation4] sm:$0xff] %vm156, %v175
      %v177 = vlaneseq
      %v178 = vshrl.u32 %v177, 7
      %v179 = vlaneseq
      %v180 = vand.u32 %v179, 127
      %vm181 = vcmp.eq.s32.totalorder %v178, %v180
      %v182 = vsel %vm181, %v149, 0.0
      %v183 = vsel %vm151, %v182, 0.0
      %v184 = vrot.slane %v183, 4
      %v185 = vadd.f32 %v183, %v184
      %v186 = vrot.slane %v185, 2
      %v187 = vadd.f32 %v185, %v186
      %v188 = vrot.slane %v187, 1
      %v189 = vadd.f32 %v187, %v188
      %190 = vst.msk [vmem:[#allocation6] sm:$0x1] %vm166, %v189
    $region29: #{tpu_custom_call.1} parent=1 // pred_fallthru
      _
    // Predicated region
    $region30: #{tpu_custom_call.1} parent=1 // pred_check
      %p191 = pneg %p37
    $region31: #{tpu_custom_call.1} parent=1 // pred_check_branch
      %193 = sbr.rel (%p191) target = $region33
    $region32: #{tpu_custom_call.1} parent=1 // pred_region
      %v194 = vld [vmem:[#allocation4] sm:$0xff]
      %v195 = vmul.f32 %v194, 1.442695
      %v196 = vpow.pop %v195
      %v197 = vld [vmem:[#allocation3] sm:$0xff]
      %v198 = vmul.f32 %v197, 2.0
      %v199 = vsub.f32 %v198, %v196
      %v200 = vlog2.pop %v199
      %v201 = vmul.f32 %v200, 0.6931472
      %v202 = vmul.f32 %v194, 2.0
      %v203 = vsub.f32 %v201, %v202
      %v204 = vld [vmem:[#allocation7] sm:$0x1]
      %v205 = vsel %vm156, %v203, 0.0
      %206 = vadd.xlane.f32.xlu0 %v205
      %v207 = vpop.xlane.xlu0 %206
      %v208 = vrot.slane %v207, 4
      %v209 = vadd.f32 %v207, %v208
      %v210 = vrot.slane %v209, 2
      %v211 = vadd.f32 %v209, %v210
      %v212 = vrot.slane %v211, 1
      %v213 = vadd.f32 %v211, %v212
      %s214 = vtos %v213
      %v215 = vstv %s214
      %v216 = vadd.f32 %v204, %v215
      %vm217 = vcmask 0
      %218 = vst.msk [vmem:[#allocation7] sm:$0x1] %vm217, %v216
    $region33: #{tpu_custom_call.1} parent=1 // pred_fallthru
      _
    // Predicated region
    $region34: #{tpu_custom_call.1} parent=1 // pred_check
      _
    $region35: #{tpu_custom_call.1} parent=1 // pred_check_branch
      %220 = sbr.rel (%p38) target = $region37
    $region36: #{tpu_custom_call.1} parent=1 // pred_region
      %v221 = vld [vmem:[#allocation5] sm:$0x1]
      %v222 = vmul.f32 %v221, 2.0
      %v223 = vld [vmem:[#allocation6] sm:$0x1]
      %v224 = vsub.f32 %v222, %v223
      %v225 = vlog2.pop %v224
      %v226 = vmul.f32 %v225, 0.6931472
      %v227 = vld [vmem:[#allocation7] sm:$0x1]
      %v228 = vsel %vm166, %v226, 0.0
      %229 = vadd.xlane.f32.xlu0 %v228
      %v230 = vpop.xlane.xlu0 %229
      %v231 = vrot.slane %v230, 4
      %v232 = vadd.f32 %v230, %v231
      %v233 = vrot.slane %v232, 2
      %v234 = vadd.f32 %v232, %v233
      %v235 = vrot.slane %v234, 1
      %v236 = vadd.f32 %v234, %v235
      %s237 = vtos %v236
      %v238 = vstv %s237
      %v239 = vadd.f32 %v227, %v238
      %v240 = vmul.f32 %v239, 0.5
      %v241 = vmul.f32 %v240, 0.125
      %vm242 = vcmask 0
      %243 = vst.msk [vmem:[#allocation13] sm:$0x1] %vm242, %v241
    $region37: #{tpu_custom_call.1} parent=1 // pred_fallthru
      _
    // Predicated region
    $region38: #{tpu_custom_call.1} parent=1 // pred_check
      _
    $region39: #{tpu_custom_call.1} parent=1 // pred_check_branch
      %245 = sbr.rel (0) target = $region41
    $region40: #{tpu_custom_call.1} parent=1 // pred_region
      %s247 = ssub.s32 16, 16
      %248 = vsyncadd [#allocation10], %s247
      %s250 = sshll.u32 [#allocation13], 4
      %s251 = int_to_ptr.vmem [resolvable:$true] %s250
      %253 = dma.vmem_to_hbm [thread:$0]  %s251, 16, %s2, [#allocation10]
    $region41: #{tpu_custom_call.1} parent=1 // pred_fallthru
      _
    // Predicated region
    $region42: #{tpu_custom_call.1} parent=1 // pred_check
      _
    $region43: #{tpu_custom_call.1} parent=1 // pred_check_branch
      %255 = sbr.rel (0) target = $region45
    $region44: #{tpu_custom_call.1} parent=1 // pred_region
      %256 = dma.done [#allocation10], 16
    $region45: #{tpu_custom_call.1} parent=1 // pred_fallthru
      _
    %257 = vsyncpa [#allocation9], 1
    %258 = vsyncpa [#allocation12], 1
    %259 = vsyncpa [#allocation10], 1

</llo_original>
